<compile_context>
chip_gen: v7x
topology: tpu7x:2x2x1
jax: 0.10.0
libtpu: 0.0.40
codegen_flags: <defaults>
</compile_context>

<pallas_src>
import functools

import jax
import jax.numpy as jnp
from jax.experimental import pallas as pl
from jax.experimental.pallas import tpu as pltpu


def gcn_kernel(x_ref, w_ref, a_ref, o_ref, *, blk_batch, n_nodes, n_pieces, out_pad):
    """One grid step = `blk_batch` batch elements (all nodes).

    x_ref: (B*Vp, LCp)   bf16, lane = l*C + c (channel minor); lane LC holds 1.0 (bias lane)
    w_ref: (LCp, P*OUTp) bf16, piece-p conv weights in lanes [p*OUTp, (p+1)*OUTp);
                         bias folded into row LC of the piece-0 block
    a_ref: (Vp, P*Vp)    f32 stacked diffusion operator [I | A1 | A1^2 | A2 | ...]
    o_ref: (B*Vp, OUTp)  f32, lane = c_out*Lout zero-padded to a multiple of 128
    """
    b, v, p, n = blk_batch, n_nodes, n_pieces, out_pad

    # Stage A: ONE fused MXU matmul — conv for every piece, every batch row, bias included.
    g = jnp.dot(x_ref[...], w_ref[...], preferred_element_type=jnp.float32)   # (B*Vp, P*OUTp)

    # Block-wide restack (no per-batch loop): move the piece index from lanes to rows.
    # 128-aligned lane slices are cheap views; one concat builds (B, P*Vp, OUTp).
    g3 = g.reshape(b, v, p * n)
    gre = jnp.concatenate([g3[:, :, i * n:(i + 1) * n] for i in range(p)], axis=1)

    # Stage B: ONE batched matmul for the whole block (kept in f32: it is a small share
    # of the FLOPs and avoids re-rounding the Stage-A result to bf16).
    a_b = jnp.broadcast_to(a_ref[...], (b, v, p * v))
    y = jnp.einsum('bvk,bkn->bvn', a_b, gre, preferred_element_type=jnp.float32)

    # Single full-block, lane-dense (multiple of 128) store.
    o_ref[...] = y.reshape(b * v, n).astype(o_ref.dtype)


def _round_up(x, m):
    return (x + m - 1) // m * m


def _vmem_bytes(b, vp, lcp, p, outp):
    """Per-grid-step VMEM estimate (bytes) for the block picker / vmem limit."""
    x_in = 2 * b * vp * lcp * 2          # bf16 x block, double-buffered
    out = 2 * b * vp * outp * 4          # f32 out block, double-buffered
    wcat = lcp * p * outp * 2            # bf16 conv weights, single-buffered
    aflat = vp * p * vp * 4              # f32 diffusion operator, single-buffered
    interm = b * vp * p * outp * 4 * 2   # f32 g + restacked gre
    interm += b * vp * p * vp * 4        # broadcast A (Stage-B lhs)
    interm += b * vp * outp * 4          # f32 y before the store
    return x_in + out + wcat + aflat + interm


def _pick_block_batch(n, vp, lcp, p, outp, *, target_rows=256,
                      vmem_budget=48 * 1024 * 1024):
    """VMEM- and MXU-aware block picker.

    Aims for >= `target_rows` rows per step (256-row MXU on v6e/v7x; also fine for
    v5e's 128-row MXU) while staying under a v7x-safe VMEM budget (64 MiB physical).
    Among block sizes that meet the row target it keeps the most grid steps
    (pipelining overlap / two v7x TensorCores); otherwise it takes the biggest
    block that fits, since bigger blocks are the dominant throughput lever.
    """
    divisors = [b for b in range(1, n + 1) if n % b == 0]
    feasible = [b for b in divisors if _vmem_bytes(b, vp, lcp, p, outp) <= vmem_budget]
    if not feasible:
        return 1
    meets = [b for b in feasible if b * vp >= target_rows]
    if meets:
        return min(meets)
    return max(feasible)


def gcn_forward(x, supports, weight, bias, *, order=2, dropout=0.0, training=False):
    """x:(N,C,V,L) f32, supports: list of (V,V), weight:(c_out,(order*S+1)*C,1,2), bias:(c_out,)."""
    N, C, V, L = x.shape
    S = len(supports)
    P = order * S + 1
    c_out = weight.shape[0]
    Lout = L - 2                        # Conv2d kernel (1,2), dilation 2, no padding
    LC = L * C
    LCp = _round_up(LC + 1, 128)        # +1 bias lane; pad K to 128. (v6e/v7x note: a K that is
                                        # a multiple of 256 would fill the 256-deep MXU better.)
    OUT = c_out * Lout
    OUTp = _round_up(OUT, 128)          # lane-dense output (unmasked vector stores)
    Vp = _round_up(V, 16)               # bf16 sublane packing: 16 rows per vreg
    f32 = jnp.float32
    bf16 = jnp.bfloat16

    # --- activations: node-major (N*Vp, LCp), channel minor, ones lane for the bias ---
    xm = jnp.transpose(x, (0, 2, 3, 1)).reshape(N, V, LC).astype(f32)
    x2d = jnp.zeros((N, Vp, LCp), f32).at[:, :V, :LC].set(xm).at[:, :, LC].set(1.0)
    x2d = x2d.reshape(N * Vp, LCp)

    # --- stacked diffusion operator [I | A1 | A1^2 | A2 | ...], node dim zero-padded ---
    def pad_a(a):
        return jnp.zeros((Vp, Vp), f32).at[:V, :V].set(a.astype(f32))
    pieces = [jnp.eye(Vp, dtype=f32)]
    for a in supports:
        ap = pad_a(a)
        ak = ap
        pieces.append(ak)
        for _ in range(2, order + 1):
            ak = ak @ ap
            pieces.append(ak)
    aflat = jnp.concatenate(pieces, axis=1)                                  # (Vp, P*Vp) f32

    # --- fold the (1,2)-dilated conv into per-piece (LC, OUT) mats, concat along lanes ---
    # Wbig[p, l*C+c, o*Lout+lo] = W[o,p*C+c,0,0]*(l==lo) + W[o,p*C+c,0,1]*(l==lo+2)
    w_r = weight[:, :, 0, :].reshape(c_out, P, C, 2).astype(f32)             # [o,p,c,k]
    lin = jnp.arange(L)[:, None]
    lo = jnp.arange(Lout)[None, :]
    sel = jnp.stack([(lin == lo).astype(f32), (lin == lo + 2).astype(f32)], axis=0)
    wbig = jnp.einsum('opck,kil->picol', w_r, sel).reshape(P, LC, OUT)
    wcat = jnp.zeros((LCp, P, OUTp), f32)
    wcat = wcat.at[:LC, :, :OUT].set(jnp.transpose(wbig, (1, 0, 2)))
    wcat = wcat.at[LC, 0, :OUT].set(jnp.repeat(bias.astype(f32), Lout))      # bias via ones lane
    wcat = wcat.reshape(LCp, P * OUTp)
    # NOTE: when weights/supports are static across calls, precompute wcat/aflat once
    # outside the steady-state path; here they are rebuilt per call (cheap at these sizes).

    # bf16 operands feed the MXU natively; Stage A accumulates in f32, Stage B stays f32.
    x2d, wcat = x2d.astype(bf16), wcat.astype(bf16)

    B = _pick_block_batch(N, Vp, LCp, P, OUTp)
    grid = (N // B,)

    vmem_need = _vmem_bytes(B, Vp, LCp, P, OUTp)
    vmem_limit = int(min(max(vmem_need + (16 << 20), 32 << 20), 56 << 20))   # v7x-safe cap

    flops = 2 * N * Vp * (LCp * P * OUTp + (P * Vp) * OUTp)
    bytes_accessed = (int(x2d.size) * 2 + int(wcat.size) * 2 + int(aflat.size) * 4
                      + N * Vp * OUTp * 4)

    kernel = functools.partial(gcn_kernel, blk_batch=B, n_nodes=Vp, n_pieces=P, out_pad=OUTp)
    out = pl.pallas_call(
        kernel,
        out_shape=jax.ShapeDtypeStruct((N * Vp, OUTp), f32),
        grid=grid,
        in_specs=[
            pl.BlockSpec((B * Vp, LCp), lambda n: (n, 0)),
            # Constant-index-map operands: never re-fetched, so single-buffer them.
            pl.BlockSpec((LCp, P * OUTp), lambda n: (0, 0), pipeline_mode=pl.Buffered(1)),
            pl.BlockSpec((Vp, P * Vp), lambda n: (0, 0), pipeline_mode=pl.Buffered(1)),
        ],
        out_specs=pl.BlockSpec((B * Vp, OUTp), lambda n: (n, 0)),
        compiler_params=pltpu.CompilerParams(
            dimension_semantics=("parallel",),
            vmem_limit_bytes=vmem_limit),
        cost_estimate=pl.CostEstimate(flops=flops, transcendentals=0,
                                      bytes_accessed=bytes_accessed),
    )(x2d, wcat, aflat)

    y = (out.reshape(N, Vp, OUTp)[:, :V, :OUT]
            .reshape(N, V, c_out, Lout).transpose(0, 2, 1, 3))
    # TODO(synk): F.dropout applied as identity (eval mode); training-mode RNG not reproduced.
    return y


def gcn_reference(x, supports, weight, bias, order):
    """Pure-JAX (f32) mirror of the PyTorch forward (eval mode), for checking."""
    out = [x]
    for a in supports:
        x1 = jnp.einsum('ncvl,wv->ncwl', x, a)
        out.append(x1)
        for _ in range(2, order + 1):
            x2 = jnp.einsum('ncvl,wv->ncwl', x1, a)
            out.append(x2)
            x1 = x2
    h = jnp.concatenate(out, axis=1)
    y = (jnp.einsum('oc,ncvl->novl', weight[:, :, 0, 0], h[:, :, :, :-2])
         + jnp.einsum('oc,ncvl->novl', weight[:, :, 0, 1], h[:, :, :, 2:])
         + bias[None, :, None, None])
    return y


if __name__ == "__main__":
    N, c_in, c_out, V, L = 2, 4, 8, 16, 16
    len_support, order, dropout = 3, 2, 0.3
    c_in_total = (order * len_support + 1) * c_in   # 28

    key = jax.random.PRNGKey(0)
    kx, kA, kw, kb = jax.random.split(key, 4)
    x = jax.random.normal(kx, (N, c_in, V, L), dtype=jnp.float32)
    A_raw = jax.random.uniform(kA, (len_support, V, V), dtype=jnp.float32)
    supports = [A_raw[s] / jnp.sum(A_raw[s], axis=1, keepdims=True)
                for s in range(len_support)]

    # deterministic Conv2d-like init: uniform(-1/sqrt(fan_in), 1/sqrt(fan_in))
    bound = 1.0 / (c_in_total * 1 * 2) ** 0.5
    weight = jax.random.uniform(kw, (c_out, c_in_total, 1, 2),
                                minval=-bound, maxval=bound, dtype=jnp.float32)
    bias = jax.random.uniform(kb, (c_out,), minval=-bound, maxval=bound,
                              dtype=jnp.float32)

    fwd = jax.jit(functools.partial(gcn_forward, order=order,
                                    dropout=dropout, training=False))
    y = jax.block_until_ready(fwd(x, supports, weight, bias))

    y_ref = gcn_reference(x, supports, weight, bias, order)
    assert y.shape == (N, c_out, V, L - 2), y.shape
    max_err = float(jnp.max(jnp.abs(y - y_ref)))
    # bf16 Stage-A operands (f32 accumulation, f32 Stage B) -> loosened tolerance.
    assert jnp.allclose(y, y_ref, atol=5e-2, rtol=5e-2), max_err
    print("KERNEL_OK")
</pallas_src>

<mosaic_0001>
module attributes {stable_mosaic.version = 11 : i64} {
  func.func @gcn_kernel(%arg0: i32, %arg1: memref<32x128xbf16, #tpu.memory_space<vmem>>, %arg2: memref<128x896xbf16, #tpu.memory_space<vmem>>, %arg3: memref<16x112xf32, #tpu.memory_space<vmem>>, %arg4: memref<32x128xf32, #tpu.memory_space<vmem>>) attributes {dimension_semantics = [#tpu.dimension_semantics<parallel>], iteration_bounds = array<i64: 1>, scalar_prefetch = 0 : i64, scratch_operands = 0 : i64, tpu.core_type = #tpu.core_type<tc>, window_params = [{transform_indices = @transform_0, window_bounds = array<i64: 32, 128>}, {pipeline_mode = #tpu.pipeline_mode<synchronous>, transform_indices = @transform_1, window_bounds = array<i64: 128, 896>}, {pipeline_mode = #tpu.pipeline_mode<synchronous>, transform_indices = @transform_2, window_bounds = array<i64: 16, 112>}, {transform_indices = @transform_3, window_bounds = array<i64: 32, 128>}]} {
    %c0 = arith.constant 0 : index
    %c0_0 = arith.constant 0 : index
    %0 = vector.load %arg1[%c0, %c0_0] : memref<32x128xbf16, #tpu.memory_space<vmem>>, vector<32x128xbf16>
    %c0_1 = arith.constant 0 : index
    %c0_2 = arith.constant 0 : index
    %1 = vector.load %arg2[%c0_1, %c0_2] : memref<128x896xbf16, #tpu.memory_space<vmem>>, vector<128x896xbf16>
    %cst = arith.constant dense<0.000000e+00> : vector<32x896xf32>
    %2 = tpu.matmul %0, %1, %cst {dimension_numbers = #tpu.dot_dimension_numbers<[1], [0], [0], [1], [0, 0, 1, 1], [], []>} : vector<32x128xbf16>, vector<128x896xbf16>, vector<32x896xf32> -> vector<32x896xf32>
    %3 = vector.shape_cast %2 : vector<32x896xf32> to vector<2x16x896xf32>
    %4 = vector.extract_strided_slice %3 {offsets = [0, 0, 0], sizes = [2, 16, 128], strides = [1, 1, 1]} : vector<2x16x896xf32> to vector<2x16x128xf32>
    %5 = vector.extract_strided_slice %3 {offsets = [0, 0, 128], sizes = [2, 16, 128], strides = [1, 1, 1]} : vector<2x16x896xf32> to vector<2x16x128xf32>
    %6 = vector.extract_strided_slice %3 {offsets = [0, 0, 256], sizes = [2, 16, 128], strides = [1, 1, 1]} : vector<2x16x896xf32> to vector<2x16x128xf32>
    %7 = vector.extract_strided_slice %3 {offsets = [0, 0, 384], sizes = [2, 16, 128], strides = [1, 1, 1]} : vector<2x16x896xf32> to vector<2x16x128xf32>
    %8 = vector.extract_strided_slice %3 {offsets = [0, 0, 512], sizes = [2, 16, 128], strides = [1, 1, 1]} : vector<2x16x896xf32> to vector<2x16x128xf32>
    %9 = vector.extract_strided_slice %3 {offsets = [0, 0, 640], sizes = [2, 16, 128], strides = [1, 1, 1]} : vector<2x16x896xf32> to vector<2x16x128xf32>
    %10 = vector.extract_strided_slice %3 {offsets = [0, 0, 768], sizes = [2, 16, 128], strides = [1, 1, 1]} : vector<2x16x896xf32> to vector<2x16x128xf32>
    %11 = tpu.concatenate %4, %5, %6, %7, %8, %9, %10 in 1 : vector<2x16x128xf32>, vector<2x16x128xf32>, vector<2x16x128xf32>, vector<2x16x128xf32>, vector<2x16x128xf32>, vector<2x16x128xf32>, vector<2x16x128xf32> -> vector<2x112x128xf32>
    %c0_3 = arith.constant 0 : index
    %c0_4 = arith.constant 0 : index
    %12 = vector.load %arg3[%c0_3, %c0_4] : memref<16x112xf32, #tpu.memory_space<vmem>>, vector<16x112xf32>
    %13 = vector.shape_cast %12 : vector<16x112xf32> to vector<1x16x112xf32>
    %14 = vector.broadcast %13 : vector<1x16x112xf32> to vector<2x16x112xf32>
    "tpu.trace_start"() <{level = 10 : i32, message = "bvk,bkn->bvn"}> : () -> ()
    %cst_5 = arith.constant dense<0.000000e+00> : vector<2x16x128xf32>
    %15 = tpu.matmul %14, %11, %cst_5 {dimension_numbers = #tpu.dot_dimension_numbers<[2], [1], [1], [2], [0, 0, 0, 1, 1, 2], [0], [0]>} : vector<2x16x112xf32>, vector<2x112x128xf32>, vector<2x16x128xf32> -> vector<2x16x128xf32>
    "tpu.trace_stop"() : () -> ()
    %16 = vector.shape_cast %15 : vector<2x16x128xf32> to vector<32x128xf32>
    %c0_6 = arith.constant 0 : index
    %c0_7 = arith.constant 0 : index
    %17 = vector.load %arg4[%c0_6, %c0_7] : memref<32x128xf32, #tpu.memory_space<vmem>>, vector<32x128xf32>
    tpu.vector_store %arg4[%c0_6, %c0_7], %16 {strides = array<i32>} : memref<32x128xf32, #tpu.memory_space<vmem>>, vector<32x128xf32>,
    return
  }
  func.func @transform_0(%arg0: i32) -> (i32, i32) {
    %c0_i32 = arith.constant 0 : i32
    %c0_i32_0 = arith.constant 0 : i32
    return %arg0, %c0_i32 : i32, i32
  }
  func.func @transform_1(%arg0: i32) -> (i32, i32) {
    %c0_i32 = arith.constant 0 : i32
    %c0_i32_0 = arith.constant 0 : i32
    %c0_i32_1 = arith.constant 0 : i32
    return %c0_i32, %c0_i32_0 : i32, i32
  }
  func.func @transform_2(%arg0: i32) -> (i32, i32) {
    %c0_i32 = arith.constant 0 : i32
    %c0_i32_0 = arith.constant 0 : i32
    %c0_i32_1 = arith.constant 0 : i32
    return %c0_i32, %c0_i32_0 : i32, i32
  }
  func.func @transform_3(%arg0: i32) -> (i32, i32) {
    %c0_i32 = arith.constant 0 : i32
    %c0_i32_0 = arith.constant 0 : i32
    return %arg0, %c0_i32 : i32, i32
  }
}

</mosaic_0001>

<llo_original>
// kernel: gcn_forward.1
$region0: #{gcn_forward.1}
  #allocation0 [shape = 'u32[]', space=smem, size = 0x4, offset = 0x4, fixed_abs, tag = 'smem constant byte address 0x4 - core index']
  #allocation1 [shape = 'u32[144,128]{1,0:T(1,128)}', space=vmem, size = 0x12000, scoped, tag = 'internal scratch']
  %s0 = inlined_call_operand.vmem [shape: bf16[32,128], index: 0, kind: input, shape index: {}]
  %s1 = inlined_call_operand.vmem [shape: bf16[128,896], index: 1, kind: input, shape index: {}]
  %s2 = inlined_call_operand.vmem [shape: f32[16,112], index: 2, kind: input, shape index: {}]
  %s3 = inlined_call_operand.vmem [shape: f32[32,128], index: 3, kind: output, shape index: {}]
  %s4 = sld [smem:[#allocation0]]
  $region22: #{gcn_forward.1} parent=0
    _
  %s6 = ssub.s32 1, %s4
  %s7 = scalar_select 0, %s6, %s4
  // Predicated region
  $region2: #{gcn_forward.1} parent=0 // pred_check
    _
  $region3: #{gcn_forward.1} parent=0 // pred_check_branch
    %9 = sbr.rel (0) target = $region5
  $region4: #{gcn_forward.1} parent=0 // pred_region
    _
  $region5: #{gcn_forward.1} parent=0 // pred_fallthru
    _
  // Predicated region
  $region6: #{gcn_forward.1} parent=0 // pred_check
    _
  $region7: #{gcn_forward.1} parent=0 // pred_check_branch
    %11 = sbr.rel (0) target = $region9
  $region8: #{gcn_forward.1} parent=0 // pred_region
    _
  $region9: #{gcn_forward.1} parent=0 // pred_fallthru
    _
  // Predicated region
  $region10: #{gcn_forward.1} parent=0 // pred_check
    _
  $region11: #{gcn_forward.1} parent=0 // pred_check_branch
    %13 = sbr.rel (0) target = $region13
  $region12: #{gcn_forward.1} parent=0 // pred_region
    _
  $region13: #{gcn_forward.1} parent=0 // pred_fallthru
    _
  %v15 = vld [vmem:[%s0] sm:$0xf]
  %v16 = vld [vmem:[%s0 + $0x4] sm:$0xf]
  %v17 = vld [vmem:[%s0 + $0x8] sm:$0xf]
  %v18 = vld [vmem:[%s0 + $0xc] sm:$0xf]
  %v19 = vld [vmem:[%s1] sm:$0xff]
  %v20 = vld [vmem:[%s1 + $0x8] sm:$0xff]
  %v21 = vld [vmem:[%s1 + $0x10] sm:$0xff]
  %v22 = vld [vmem:[%s1 + $0x18] sm:$0xf]
  %v23 = vld [vmem:[%s1 + $0x1c] sm:$0xff]
  %v24 = vld [vmem:[%s1 + $0x24] sm:$0xff]
  %v25 = vld [vmem:[%s1 + $0x2c] sm:$0xff]
  %v26 = vld [vmem:[%s1 + $0x34] sm:$0xf]
  %v27 = vld [vmem:[%s1 + $0x38] sm:$0xff]
  %v28 = vld [vmem:[%s1 + $0x40] sm:$0xff]
  %v29 = vld [vmem:[%s1 + $0x48] sm:$0xff]
  %v30 = vld [vmem:[%s1 + $0x50] sm:$0xf]
  %v31 = vld [vmem:[%s1 + $0x54] sm:$0xff]
  %v32 = vld [vmem:[%s1 + $0x5c] sm:$0xff]
  %v33 = vld [vmem:[%s1 + $0x64] sm:$0xff]
  %v34 = vld [vmem:[%s1 + $0x6c] sm:$0xf]
  %v35 = vld [vmem:[%s1 + $0x70] sm:$0xff]
  %v36 = vld [vmem:[%s1 + $0x78] sm:$0xff]
  %v37 = vld [vmem:[%s1 + $0x80] sm:$0xff]
  %v38 = vld [vmem:[%s1 + $0x88] sm:$0xf]
  %v39 = vld [vmem:[%s1 + $0x8c] sm:$0xff]
  %v40 = vld [vmem:[%s1 + $0x94] sm:$0xff]
  %v41 = vld [vmem:[%s1 + $0x9c] sm:$0xff]
  %v42 = vld [vmem:[%s1 + $0xa4] sm:$0xf]
  %v43 = vld [vmem:[%s1 + $0xa8] sm:$0xff]
  %v44 = vld [vmem:[%s1 + $0xb0] sm:$0xff]
  %v45 = vld [vmem:[%s1 + $0xb8] sm:$0xff]
  %v46 = vld [vmem:[%s1 + $0xc0] sm:$0xf]
  %v47 = vld [vmem:[%s1 + $0xc4] sm:$0xff]
  %v48 = vld [vmem:[%s1 + $0xcc] sm:$0xff]
  %v49 = vld [vmem:[%s1 + $0xd4] sm:$0xff]
  %v50 = vld [vmem:[%s1 + $0xdc] sm:$0xf]
  %v51 = vld [vmem:[%s1 + $0xe0] sm:$0xff]
  %v52 = vld [vmem:[%s1 + $0xe8] sm:$0xff]
  %v53 = vld [vmem:[%s1 + $0xf0] sm:$0xff]
  %v54 = vld [vmem:[%s1 + $0xf8] sm:$0xf]
  %v55 = vld [vmem:[%s1 + $0xfc] sm:$0xff]
  %v56 = vld [vmem:[%s1 + $0x104] sm:$0xff]
  %v57 = vld [vmem:[%s1 + $0x10c] sm:$0xff]
  %v58 = vld [vmem:[%s1 + $0x114] sm:$0xf]
  %v59 = vld [vmem:[%s1 + $0x118] sm:$0xff]
  %v60 = vld [vmem:[%s1 + $0x120] sm:$0xff]
  %v61 = vld [vmem:[%s1 + $0x128] sm:$0xff]
  %v62 = vld [vmem:[%s1 + $0x130] sm:$0xf]
  %v63 = vld [vmem:[%s1 + $0x134] sm:$0xff]
  %v64 = vld [vmem:[%s1 + $0x13c] sm:$0xff]
  %v65 = vld [vmem:[%s1 + $0x144] sm:$0xff]
  %v66 = vld [vmem:[%s1 + $0x14c] sm:$0xf]
  %v67 = vld [vmem:[%s1 + $0x150] sm:$0xff]
  %v68 = vld [vmem:[%s1 + $0x158] sm:$0xff]
  %v69 = vld [vmem:[%s1 + $0x160] sm:$0xff]
  %v70 = vld [vmem:[%s1 + $0x168] sm:$0xf]
  %v71 = vld [vmem:[%s1 + $0x16c] sm:$0xff]
  %v72 = vld [vmem:[%s1 + $0x174] sm:$0xff]
  %v73 = vld [vmem:[%s1 + $0x17c] sm:$0xff]
  %v74 = vld [vmem:[%s1 + $0x184] sm:$0xf]
  %v75 = vld [vmem:[%s1 + $0x188] sm:$0xff]
  %v76 = vld [vmem:[%s1 + $0x190] sm:$0xff]
  %v77 = vld [vmem:[%s1 + $0x198] sm:$0xff]
  %v78 = vld [vmem:[%s1 + $0x1a0] sm:$0xf]
  %v79 = vld [vmem:[%s1 + $0x1a4] sm:$0xff]
  %v80 = vld [vmem:[%s1 + $0x1ac] sm:$0xff]
  %v81 = vld [vmem:[%s1 + $0x1b4] sm:$0xff]
  %v82 = vld [vmem:[%s1 + $0x1bc] sm:$0xf]
  %v87 = vunpack.c.l.b16 %v15
  %v88 = vunpack.c.l.b16 %v16
  %v89 = vunpack.c.l.b16 %v17
  %v90 = vunpack.c.l.b16 %v18
  %v91 = vpack.c.b16 %v88, %v87
  %v92 = vpack.c.b16 %v90, %v89
  %v159 = vunpack.c.l.b16 %v19
  %v160 = vunpack.c.h.b16 %v19
  %v161 = vunpack.c.l.b16 %v20
  %v162 = vunpack.c.h.b16 %v20
  %v163 = vunpack.c.l.b16 %v21
  %v164 = vunpack.c.h.b16 %v21
  %v165 = vunpack.c.l.b16 %v22
  %v166 = vunpack.c.l.b16 %v23
  %v167 = vunpack.c.h.b16 %v23
  %v168 = vunpack.c.l.b16 %v24
  %v169 = vunpack.c.h.b16 %v24
  %v170 = vunpack.c.l.b16 %v25
  %v171 = vunpack.c.h.b16 %v25
  %v172 = vunpack.c.l.b16 %v26
  %v173 = vunpack.c.l.b16 %v27
  %v174 = vunpack.c.h.b16 %v27
  %v175 = vunpack.c.l.b16 %v28
  %v176 = vunpack.c.h.b16 %v28
  %v177 = vunpack.c.l.b16 %v29
  %v178 = vunpack.c.h.b16 %v29
  %v179 = vunpack.c.l.b16 %v30
  %v180 = vunpack.c.l.b16 %v31
  %v181 = vunpack.c.h.b16 %v31
  %v182 = vunpack.c.l.b16 %v32
  %v183 = vunpack.c.h.b16 %v32
  %v184 = vunpack.c.l.b16 %v33
  %v185 = vunpack.c.h.b16 %v33
  %v186 = vunpack.c.l.b16 %v34
  %v187 = vunpack.c.l.b16 %v35
  %v188 = vunpack.c.h.b16 %v35
  %v189 = vunpack.c.l.b16 %v36
  %v190 = vunpack.c.h.b16 %v36
  %v191 = vunpack.c.l.b16 %v37
  %v192 = vunpack.c.h.b16 %v37
  %v193 = vunpack.c.l.b16 %v38
  %v194 = vunpack.c.l.b16 %v39
  %v195 = vunpack.c.h.b16 %v39
  %v196 = vunpack.c.l.b16 %v40
  %v197 = vunpack.c.h.b16 %v40
  %v198 = vunpack.c.l.b16 %v41
  %v199 = vunpack.c.h.b16 %v41
  %v200 = vunpack.c.l.b16 %v42
  %v201 = vunpack.c.l.b16 %v43
  %v202 = vunpack.c.h.b16 %v43
  %v203 = vunpack.c.l.b16 %v44
  %v204 = vunpack.c.h.b16 %v44
  %v205 = vunpack.c.l.b16 %v45
  %v206 = vunpack.c.h.b16 %v45
  %v207 = vunpack.c.l.b16 %v46
  %v208 = vunpack.c.l.b16 %v47
  %v209 = vunpack.c.h.b16 %v47
  %v210 = vunpack.c.l.b16 %v48
  %v211 = vunpack.c.h.b16 %v48
  %v212 = vunpack.c.l.b16 %v49
  %v213 = vunpack.c.h.b16 %v49
  %v214 = vunpack.c.l.b16 %v50
  %v215 = vunpack.c.l.b16 %v51
  %v216 = vunpack.c.h.b16 %v51
  %v217 = vunpack.c.l.b16 %v52
  %v218 = vunpack.c.h.b16 %v52
  %v219 = vunpack.c.l.b16 %v53
  %v220 = vunpack.c.h.b16 %v53
  %v221 = vunpack.c.l.b16 %v54
  %v222 = vunpack.c.l.b16 %v55
  %v223 = vunpack.c.h.b16 %v55
  %v224 = vunpack.c.l.b16 %v56
  %v225 = vunpack.c.h.b16 %v56
  %v226 = vunpack.c.l.b16 %v57
  %v227 = vunpack.c.h.b16 %v57
  %v228 = vunpack.c.l.b16 %v58
  %v229 = vunpack.c.l.b16 %v59
  %v230 = vunpack.c.h.b16 %v59
  %v231 = vunpack.c.l.b16 %v60
  %v232 = vunpack.c.h.b16 %v60
  %v233 = vunpack.c.l.b16 %v61
  %v234 = vunpack.c.h.b16 %v61
  %v235 = vunpack.c.l.b16 %v62
  %v236 = vunpack.c.l.b16 %v63
  %v237 = vunpack.c.h.b16 %v63
  %v238 = vunpack.c.l.b16 %v64
  %v239 = vunpack.c.h.b16 %v64
  %v240 = vunpack.c.l.b16 %v65
  %v241 = vunpack.c.h.b16 %v65
  %v242 = vunpack.c.l.b16 %v66
  %v243 = vunpack.c.l.b16 %v67
  %v244 = vunpack.c.h.b16 %v67
  %v245 = vunpack.c.l.b16 %v68
  %v246 = vunpack.c.h.b16 %v68
  %v247 = vunpack.c.l.b16 %v69
  %v248 = vunpack.c.h.b16 %v69
  %v249 = vunpack.c.l.b16 %v70
  %v250 = vunpack.c.l.b16 %v71
  %v251 = vunpack.c.h.b16 %v71
  %v252 = vunpack.c.l.b16 %v72
  %v253 = vunpack.c.h.b16 %v72
  %v254 = vunpack.c.l.b16 %v73
  %v255 = vunpack.c.h.b16 %v73
  %v256 = vunpack.c.l.b16 %v74
  %v257 = vunpack.c.l.b16 %v75
  %v258 = vunpack.c.h.b16 %v75
  %v259 = vunpack.c.l.b16 %v76
  %v260 = vunpack.c.h.b16 %v76
  %v261 = vunpack.c.l.b16 %v77
  %v262 = vunpack.c.h.b16 %v77
  %v263 = vunpack.c.l.b16 %v78
  %v264 = vunpack.c.l.b16 %v79
  %v265 = vunpack.c.h.b16 %v79
  %v266 = vunpack.c.l.b16 %v80
  %v267 = vunpack.c.h.b16 %v80
  %v268 = vunpack.c.l.b16 %v81
  %v269 = vunpack.c.h.b16 %v81
  %v270 = vunpack.c.l.b16 %v82
  %v271 = vpack.c.b16 %v166, %v159
  %v272 = vpack.c.b16 %v167, %v160
  %v273 = vpack.c.b16 %v168, %v161
  %v274 = vpack.c.b16 %v169, %v162
  %v275 = vpack.c.b16 %v170, %v163
  %v276 = vpack.c.b16 %v171, %v164
  %v277 = vpack.c.b16 %v172, %v165
  %v278 = vpack.c.b16 %v180, %v173
  %v279 = vpack.c.b16 %v181, %v174
  %v280 = vpack.c.b16 %v182, %v175
  %v281 = vpack.c.b16 %v183, %v176
  %v282 = vpack.c.b16 %v184, %v177
  %v283 = vpack.c.b16 %v185, %v178
  %v284 = vpack.c.b16 %v186, %v179
  %v285 = vpack.c.b16 %v194, %v187
  %v286 = vpack.c.b16 %v195, %v188
  %v287 = vpack.c.b16 %v196, %v189
  %v288 = vpack.c.b16 %v197, %v190
  %v289 = vpack.c.b16 %v198, %v191
  %v290 = vpack.c.b16 %v199, %v192
  %v291 = vpack.c.b16 %v200, %v193
  %v292 = vpack.c.b16 %v208, %v201
  %v293 = vpack.c.b16 %v209, %v202
  %v294 = vpack.c.b16 %v210, %v203
  %v295 = vpack.c.b16 %v211, %v204
  %v296 = vpack.c.b16 %v212, %v205
  %v297 = vpack.c.b16 %v213, %v206
  %v298 = vpack.c.b16 %v214, %v207
  %v299 = vpack.c.b16 %v222, %v215
  %v300 = vpack.c.b16 %v223, %v216
  %v301 = vpack.c.b16 %v224, %v217
  %v302 = vpack.c.b16 %v225, %v218
  %v303 = vpack.c.b16 %v226, %v219
  %v304 = vpack.c.b16 %v227, %v220
  %v305 = vpack.c.b16 %v228, %v221
  %v306 = vpack.c.b16 %v236, %v229
  %v307 = vpack.c.b16 %v237, %v230
  %v308 = vpack.c.b16 %v238, %v231
  %v309 = vpack.c.b16 %v239, %v232
  %v310 = vpack.c.b16 %v240, %v233
  %v311 = vpack.c.b16 %v241, %v234
  %v312 = vpack.c.b16 %v242, %v235
  %v313 = vpack.c.b16 %v250, %v243
  %v314 = vpack.c.b16 %v251, %v244
  %v315 = vpack.c.b16 %v252, %v245
  %v316 = vpack.c.b16 %v253, %v246
  %v317 = vpack.c.b16 %v254, %v247
  %v318 = vpack.c.b16 %v255, %v248
  %v319 = vpack.c.b16 %v256, %v249
  %v320 = vpack.c.b16 %v264, %v257
  %v321 = vpack.c.b16 %v265, %v258
  %v322 = vpack.c.b16 %v266, %v259
  %v323 = vpack.c.b16 %v267, %v260
  %v324 = vpack.c.b16 %v268, %v261
  %v325 = vpack.c.b16 %v269, %v262
  %v326 = vpack.c.b16 %v270, %v263
  %383 = vmatprep.subr.bf16.mxu0 %v272
  %384 = vmatpush1.bf16.msra.mxu0 %v271
  %385 = vmatprep.subr.bf16.mxu0 %v279
  %386 = vmatpush1.bf16.msra.mxu0 %v278
  %387 = vmatprep.subr.bf16.mxu0 %v286
  %388 = vmatpush1.bf16.msra.mxu0 %v285
  %389 = vmatprep.subr.bf16.mxu0 %v293
  %390 = vmatpush1.bf16.msra.mxu0 %v292
  %391 = vmatprep.subr.bf16.mxu0 %v300
  %392 = vmatpush1.bf16.msra.mxu0 %v299
  %393 = vmatprep.subr.bf16.mxu0 %v307
  %394 = vmatpush1.bf16.msra.mxu0 %v306
  %395 = vmatprep.subr.bf16.mxu0 %v314
  %396 = vmatpush1.bf16.msra.mxu0 %v313
  %397 = vmatprep.subr.bf16.mxu0 %v321
  %398 = vmatpush1.bf16.msra.mxu0 %v320
  %399 = vmatprep.subr.bf16.mxu0 0
  %400 = vmatpush1.bf16.msra.mxu0 0
  %401 = vmatprep.subr.bf16.mxu0 0
  %402 = vmatpush1.bf16.msra.mxu0 0
  %403 = vmatprep.subr.bf16.mxu0 0
  %404 = vmatpush1.bf16.msra.mxu0 0
  %405 = vmatprep.subr.bf16.mxu0 0
  %406 = vmatpush1.bf16.msra.mxu0 0
  %407 = vmatprep.subr.bf16.mxu0 0
  %408 = vmatpush1.bf16.msra.mxu0 0
  %409 = vmatprep.subr.bf16.mxu0 0
  %410 = vmatpush1.bf16.msra.mxu0 0
  %411 = vmatprep.subr.bf16.mxu0 0
  %412 = vmatpush1.bf16.msra.mxu0 0
  %413 = vmatprep.subr.bf16.mxu0 0
  %414 = vmatpush1.bf16.msra.mxu0 0
  %415 = vmatprep.mubr.bf16.mxu0 0
  %416 = vmatmul.mubr.bf16.gmra.mrb[0].mxu0 %v91
  %v417 = vpop.f32.mrb[0].mxu0
  %v418 = vadd.f32 0.0, %v417
  %v419 = vpop.f32.mrb[0].mxu0
  %v420 = vadd.f32 0.0, %v419
  %v421 = vpop.f32.mrb[0].mxu0
  %v422 = vadd.f32 0.0, %v421
  %v423 = vpop.f32.mrb[0].mxu0
  %v424 = vadd.f32 0.0, %v423
  %425 = vmatprep.mubr.bf16.mxu0 0
  %426 = vmatmul.mubr.bf16.gmra.mrb[0].mxu0 %v92
  %v427 = vpop.f32.mrb[0].mxu0
  %v428 = vadd.f32 0.0, %v427
  %v429 = vpop.f32.mrb[0].mxu0
  %v430 = vadd.f32 0.0, %v429
  %v431 = vpop.f32.mrb[0].mxu0
  %v432 = vadd.f32 0.0, %v431
  %v433 = vpop.f32.mrb[0].mxu0
  %v434 = vadd.f32 0.0, %v433
  %435 = vdwg.mxu0
  %436 = vmatprep.subr.bf16.mxu0 %v274
  %437 = vmatpush1.bf16.msra.mxu0 %v273
  %438 = vmatprep.subr.bf16.mxu0 %v281
  %439 = vmatpush1.bf16.msra.mxu0 %v280
  %440 = vmatprep.subr.bf16.mxu0 %v288
  %441 = vmatpush1.bf16.msra.mxu0 %v287
  %442 = vmatprep.subr.bf16.mxu0 %v295
  %443 = vmatpush1.bf16.msra.mxu0 %v294
  %444 = vmatprep.subr.bf16.mxu0 %v302
  %445 = vmatpush1.bf16.msra.mxu0 %v301
  %446 = vmatprep.subr.bf16.mxu0 %v309
  %447 = vmatpush1.bf16.msra.mxu0 %v308
  %448 = vmatprep.subr.bf16.mxu0 %v316
  %449 = vmatpush1.bf16.msra.mxu0 %v315
  %450 = vmatprep.subr.bf16.mxu0 %v323
  %451 = vmatpush1.bf16.msra.mxu0 %v322
  %452 = vmatprep.subr.bf16.mxu0 0
  %453 = vmatpush1.bf16.msra.mxu0 0
  %454 = vmatprep.subr.bf16.mxu0 0
  %455 = vmatpush1.bf16.msra.mxu0 0
  %456 = vmatprep.subr.bf16.mxu0 0
  %457 = vmatpush1.bf16.msra.mxu0 0
  %458 = vmatprep.subr.bf16.mxu0 0
  %459 = vmatpush1.bf16.msra.mxu0 0
  %460 = vmatprep.subr.bf16.mxu0 0
  %461 = vmatpush1.bf16.msra.mxu0 0
  %462 = vmatprep.subr.bf16.mxu0 0
  %463 = vmatpush1.bf16.msra.mxu0 0
  %464 = vmatprep.subr.bf16.mxu0 0
  %465 = vmatpush1.bf16.msra.mxu0 0
  %466 = vmatprep.subr.bf16.mxu0 0
  %467 = vmatpush1.bf16.msra.mxu0 0
  %468 = vmatprep.mubr.bf16.mxu0 0
  %469 = vmatmul.mubr.bf16.gmra.mrb[0].mxu0 %v91
  %v470 = vpop.f32.mrb[0].mxu0
  %v471 = vadd.f32 0.0, %v470
  %v472 = vpop.f32.mrb[0].mxu0
  %v473 = vadd.f32 0.0, %v472
  %v474 = vpop.f32.mrb[0].mxu0
  %v475 = vadd.f32 0.0, %v474
  %v476 = vpop.f32.mrb[0].mxu0
  %v477 = vadd.f32 0.0, %v476
  %478 = vmatprep.mubr.bf16.mxu0 0
  %479 = vmatmul.mubr.bf16.gmra.mrb[0].mxu0 %v92
  %v480 = vpop.f32.mrb[0].mxu0
  %v481 = vadd.f32 0.0, %v480
  %v482 = vpop.f32.mrb[0].mxu0
  %v483 = vadd.f32 0.0, %v482
  %v484 = vpop.f32.mrb[0].mxu0
  %v485 = vadd.f32 0.0, %v484
  %v486 = vpop.f32.mrb[0].mxu0
  %v487 = vadd.f32 0.0, %v486
  %488 = vdwg.mxu0
  %489 = vmatprep.subr.bf16.mxu0 %v276
  %490 = vmatpush1.bf16.msra.mxu0 %v275
  %491 = vmatprep.subr.bf16.mxu0 %v283
  %492 = vmatpush1.bf16.msra.mxu0 %v282
  %493 = vmatprep.subr.bf16.mxu0 %v290
  %494 = vmatpush1.bf16.msra.mxu0 %v289
  %495 = vmatprep.subr.bf16.mxu0 %v297
  %496 = vmatpush1.bf16.msra.mxu0 %v296
  %497 = vmatprep.subr.bf16.mxu0 %v304
  %498 = vmatpush1.bf16.msra.mxu0 %v303
  %499 = vmatprep.subr.bf16.mxu0 %v311
  %500 = vmatpush1.bf16.msra.mxu0 %v310
  %501 = vmatprep.subr.bf16.mxu0 %v318
  %502 = vmatpush1.bf16.msra.mxu0 %v317
  %503 = vmatprep.subr.bf16.mxu0 %v325
  %504 = vmatpush1.bf16.msra.mxu0 %v324
  %505 = vmatprep.subr.bf16.mxu0 0
  %506 = vmatpush1.bf16.msra.mxu0 0
  %507 = vmatprep.subr.bf16.mxu0 0
  %508 = vmatpush1.bf16.msra.mxu0 0
  %509 = vmatprep.subr.bf16.mxu0 0
  %510 = vmatpush1.bf16.msra.mxu0 0
  %511 = vmatprep.subr.bf16.mxu0 0
  %512 = vmatpush1.bf16.msra.mxu0 0
  %513 = vmatprep.subr.bf16.mxu0 0
  %514 = vmatpush1.bf16.msra.mxu0 0
  %515 = vmatprep.subr.bf16.mxu0 0
  %516 = vmatpush1.bf16.msra.mxu0 0
  %517 = vmatprep.subr.bf16.mxu0 0
  %518 = vmatpush1.bf16.msra.mxu0 0
  %519 = vmatprep.subr.bf16.mxu0 0
  %520 = vmatpush1.bf16.msra.mxu0 0
  %521 = vmatprep.mubr.bf16.mxu0 0
  %522 = vmatmul.mubr.bf16.gmra.mrb[0].mxu0 %v91
  %v523 = vpop.f32.mrb[0].mxu0
  %v524 = vadd.f32 0.0, %v523
  %v525 = vpop.f32.mrb[0].mxu0
  %v526 = vadd.f32 0.0, %v525
  %v527 = vpop.f32.mrb[0].mxu0
  %v528 = vadd.f32 0.0, %v527
  %v529 = vpop.f32.mrb[0].mxu0
  %v530 = vadd.f32 0.0, %v529
  %531 = vmatprep.mubr.bf16.mxu0 0
  %532 = vmatmul.mubr.bf16.gmra.mrb[0].mxu0 %v92
  %v533 = vpop.f32.mrb[0].mxu0
  %v534 = vadd.f32 0.0, %v533
  %v535 = vpop.f32.mrb[0].mxu0
  %v536 = vadd.f32 0.0, %v535
  %v537 = vpop.f32.mrb[0].mxu0
  %v538 = vadd.f32 0.0, %v537
  %v539 = vpop.f32.mrb[0].mxu0
  %v540 = vadd.f32 0.0, %v539
  %541 = vdwg.mxu0
  %542 = vmatprep.subr.bf16.mxu0 0
  %543 = vmatpush1.bf16.msra.mxu0 %v277
  %544 = vmatprep.subr.bf16.mxu0 0
  %545 = vmatpush1.bf16.msra.mxu0 %v284
  %546 = vmatprep.subr.bf16.mxu0 0
  %547 = vmatpush1.bf16.msra.mxu0 %v291
  %548 = vmatprep.subr.bf16.mxu0 0
  %549 = vmatpush1.bf16.msra.mxu0 %v298
  %550 = vmatprep.subr.bf16.mxu0 0
  %551 = vmatpush1.bf16.msra.mxu0 %v305
  %552 = vmatprep.subr.bf16.mxu0 0
  %553 = vmatpush1.bf16.msra.mxu0 %v312
  %554 = vmatprep.subr.bf16.mxu0 0
  %555 = vmatpush1.bf16.msra.mxu0 %v319
  %556 = vmatprep.subr.bf16.mxu0 0
  %557 = vmatpush1.bf16.msra.mxu0 %v326
  %558 = vmatprep.subr.bf16.mxu0 0
  %559 = vmatpush1.bf16.msra.mxu0 0
  %560 = vmatprep.subr.bf16.mxu0 0
  %561 = vmatpush1.bf16.msra.mxu0 0
  %562 = vmatprep.subr.bf16.mxu0 0
  %563 = vmatpush1.bf16.msra.mxu0 0
  %564 = vmatprep.subr.bf16.mxu0 0
  %565 = vmatpush1.bf16.msra.mxu0 0
  %566 = vmatprep.subr.bf16.mxu0 0
  %567 = vmatpush1.bf16.msra.mxu0 0
  %568 = vmatprep.subr.bf16.mxu0 0
  %569 = vmatpush1.bf16.msra.mxu0 0
  %570 = vmatprep.subr.bf16.mxu0 0
  %571 = vmatpush1.bf16.msra.mxu0 0
  %572 = vmatprep.subr.bf16.mxu0 0
  %573 = vmatpush1.bf16.msra.mxu0 0
  %574 = vmatprep.mubr.bf16.mxu0 0
  %575 = vmatmul.mubr.bf16.gmra.mrb[0].mxu0 %v91
  %v576 = vpop.f32.mrb[0].mxu0
  %v577 = vadd.f32 0.0, %v576
  %v578 = vpop.f32.mrb[0].mxu0
  %v579 = vpop.f32.mrb[0].mxu0
  %v580 = vadd.f32 0.0, %v579
  %v581 = vpop.f32.mrb[0].mxu0
  %582 = vmatprep.mubr.bf16.mxu0 0
  %583 = vmatmul.mubr.bf16.gmra.mrb[0].mxu0 %v92
  %v584 = vpop.f32.mrb[0].mxu0
  %v585 = vadd.f32 0.0, %v584
  %v586 = vpop.f32.mrb[0].mxu0
  %v587 = vpop.f32.mrb[0].mxu0
  %v588 = vadd.f32 0.0, %v587
  %v589 = vpop.f32.mrb[0].mxu0
  %590 = vdwg.mxu0
  %v591 = vld [vmem:[%s2] sm:$0xff]
  %v592 = vld [vmem:[%s2 + $0x8] sm:$0xff]
  %vm593 = vcmask 916480
  %v595 = vsel %vm593, %v591, 0
  %v598 = vsel %vm593, %v592, 0
  %600 = vmatprep.subr.mxu0 0.0
  %601 = vmatpush1.msra.mxu0 %v418
  %602 = vmatprep.subr.mxu0 0.0
  %603 = vmatpush1.msra.mxu0 %v422
  %604 = vmatprep.subr.mxu0 0.0
  %605 = vmatpush1.msra.mxu0 %v420
  %606 = vmatprep.subr.mxu0 0.0
  %607 = vmatpush1.msra.mxu0 %v424
  %608 = vmatprep.subr.mxu0 0.0
  %609 = vmatpush1.msra.mxu0 %v471
  %610 = vmatprep.subr.mxu0 0.0
  %611 = vmatpush1.msra.mxu0 %v475
  %612 = vmatprep.subr.mxu0 0.0
  %613 = vmatpush1.msra.mxu0 %v473
  %614 = vmatprep.subr.mxu0 0.0
  %615 = vmatpush1.msra.mxu0 %v477
  %616 = vmatprep.subr.mxu0 0.0
  %617 = vmatpush1.msra.mxu0 %v524
  %618 = vmatprep.subr.mxu0 0.0
  %619 = vmatpush1.msra.mxu0 %v528
  %620 = vmatprep.subr.mxu0 0.0
  %621 = vmatpush1.msra.mxu0 %v526
  %622 = vmatprep.subr.mxu0 0.0
  %623 = vmatpush1.msra.mxu0 %v530
  %624 = vmatprep.subr.mxu0 0.0
  %625 = vmatpush1.msra.mxu0 %v577
  %626 = vmatprep.subr.mxu0 0.0
  %627 = vmatpush1.msra.mxu0 %v580
  %628 = vmatprep.subr.mxu0 0.0
  %629 = vmatpush1.msra.mxu0 0.0
  %630 = vmatprep.subr.mxu0 0.0
  %631 = vmatpush1.msra.mxu0 0.0
  %632 = vmatprep.subr.mxu0 0.0
  %633 = vmatpush1.msra.mxu0 0.0
  %634 = vmatprep.subr.mxu0 0.0
  %635 = vmatpush1.msra.mxu0 0.0
  %636 = vmatprep.subr.mxu0 0.0
  %637 = vmatpush1.msra.mxu0 0.0
  %638 = vmatprep.subr.mxu0 0.0
  %639 = vmatpush1.msra.mxu0 0.0
  %640 = vmatprep.subr.mxu0 0.0
  %641 = vmatpush1.msra.mxu0 0.0
  %642 = vmatprep.subr.mxu0 0.0
  %643 = vmatpush1.msra.mxu0 0.0
  %644 = vmatprep.subr.mxu0 0.0
  %645 = vmatpush1.msra.mxu0 0.0
  %646 = vmatprep.subr.mxu0 0.0
  %647 = vmatpush1.msra.mxu0 0.0
  %648 = vmatprep.subr.mxu0 0.0
  %649 = vmatpush1.msra.mxu0 0.0
  %650 = vmatprep.subr.mxu0 0.0
  %651 = vmatpush1.msra.mxu0 0.0
  %652 = vmatprep.subr.mxu0 0.0
  %653 = vmatpush1.msra.mxu0 0.0
  %654 = vmatprep.subr.mxu0 0.0
  %655 = vmatpush1.msra.mxu0 0.0
  %656 = vmatprep.subr.mxu0 0.0
  %657 = vmatpush1.msra.mxu0 0.0
  %658 = vmatprep.subr.mxu0 0.0
  %659 = vmatpush1.msra.mxu0 0.0
  %660 = vmatprep.subr.mxu0 0.0
  %661 = vmatpush1.msra.mxu0 0.0
  %662 = vmatprep.subr.mxu0 0.0
  %663 = vmatpush1.msra.mxu0 0.0
  %664 = vmatprep.mubr.f32.mxu0 0.0
  %665 = vmatmul.mubr.f32.gmra.mrb[0].mxu0 %v595
  %v666 = vpop.f32.mrb[0].mxu0
  %v667 = vadd.f32 0.0, %v666
  %v668 = vpop.f32.mrb[0].mxu0
  %669 = vmatprep.mubr.f32.mxu0 0.0
  %670 = vmatmul.mubr.f32.gmra.mrb[0].mxu0 %v598
  %v671 = vpop.f32.mrb[0].mxu0
  %v672 = vadd.f32 0.0, %v671
  %v673 = vpop.f32.mrb[0].mxu0
  %674 = vdwg.mxu0
  %675 = vmatprep.subr.mxu0 0.0
  %676 = vmatpush1.msra.mxu0 %v428
  %677 = vmatprep.subr.mxu0 0.0
  %678 = vmatpush1.msra.mxu0 %v432
  %679 = vmatprep.subr.mxu0 0.0
  %680 = vmatpush1.msra.mxu0 %v430
  %681 = vmatprep.subr.mxu0 0.0
  %682 = vmatpush1.msra.mxu0 %v434
  %683 = vmatprep.subr.mxu0 0.0
  %684 = vmatpush1.msra.mxu0 %v481
  %685 = vmatprep.subr.mxu0 0.0
  %686 = vmatpush1.msra.mxu0 %v485
  %687 = vmatprep.subr.mxu0 0.0
  %688 = vmatpush1.msra.mxu0 %v483
  %689 = vmatprep.subr.mxu0 0.0
  %690 = vmatpush1.msra.mxu0 %v487
  %691 = vmatprep.subr.mxu0 0.0
  %692 = vmatpush1.msra.mxu0 %v534
  %693 = vmatprep.subr.mxu0 0.0
  %694 = vmatpush1.msra.mxu0 %v538
  %695 = vmatprep.subr.mxu0 0.0
  %696 = vmatpush1.msra.mxu0 %v536
  %697 = vmatprep.subr.mxu0 0.0
  %698 = vmatpush1.msra.mxu0 %v540
  %699 = vmatprep.subr.mxu0 0.0
  %700 = vmatpush1.msra.mxu0 %v585
  %701 = vmatprep.subr.mxu0 0.0
  %702 = vmatpush1.msra.mxu0 %v588
  %703 = vmatprep.subr.mxu0 0.0
  %704 = vmatpush1.msra.mxu0 0.0
  %705 = vmatprep.subr.mxu0 0.0
  %706 = vmatpush1.msra.mxu0 0.0
  %707 = vmatprep.subr.mxu0 0.0
  %708 = vmatpush1.msra.mxu0 0.0
  %709 = vmatprep.subr.mxu0 0.0
  %710 = vmatpush1.msra.mxu0 0.0
  %711 = vmatprep.subr.mxu0 0.0
  %712 = vmatpush1.msra.mxu0 0.0
  %713 = vmatprep.subr.mxu0 0.0
  %714 = vmatpush1.msra.mxu0 0.0
  %715 = vmatprep.subr.mxu0 0.0
  %716 = vmatpush1.msra.mxu0 0.0
  %717 = vmatprep.subr.mxu0 0.0
  %718 = vmatpush1.msra.mxu0 0.0
  %719 = vmatprep.subr.mxu0 0.0
  %720 = vmatpush1.msra.mxu0 0.0
  %721 = vmatprep.subr.mxu0 0.0
  %722 = vmatpush1.msra.mxu0 0.0
  %723 = vmatprep.subr.mxu0 0.0
  %724 = vmatpush1.msra.mxu0 0.0
  %725 = vmatprep.subr.mxu0 0.0
  %726 = vmatpush1.msra.mxu0 0.0
  %727 = vmatprep.subr.mxu0 0.0
  %728 = vmatpush1.msra.mxu0 0.0
  %729 = vmatprep.subr.mxu0 0.0
  %730 = vmatpush1.msra.mxu0 0.0
  %731 = vmatprep.subr.mxu0 0.0
  %732 = vmatpush1.msra.mxu0 0.0
  %733 = vmatprep.subr.mxu0 0.0
  %734 = vmatpush1.msra.mxu0 0.0
  %735 = vmatprep.subr.mxu0 0.0
  %736 = vmatpush1.msra.mxu0 0.0
  %737 = vmatprep.subr.mxu0 0.0
  %738 = vmatpush1.msra.mxu0 0.0
  %739 = vmatprep.mubr.f32.mxu0 0.0
  %740 = vmatmul.mubr.f32.gmra.mrb[0].mxu0 %v595
  %v741 = vpop.f32.mrb[0].mxu0
  %v742 = vadd.f32 0.0, %v741
  %v743 = vpop.f32.mrb[0].mxu0
  %744 = vmatprep.mubr.f32.mxu0 0.0
  %745 = vmatmul.mubr.f32.gmra.mrb[0].mxu0 %v598
  %v746 = vpop.f32.mrb[0].mxu0
  %v747 = vadd.f32 0.0, %v746
  %v748 = vpop.f32.mrb[0].mxu0
  %749 = vdwg.mxu0
  %750 = vst [vmem:[%s3] sm:$0xff] %v667
  %751 = vst [vmem:[%s3 + $0x8] sm:$0xff] %v672
  %752 = vst [vmem:[%s3 + $0x10] sm:$0xff] %v742
  %753 = vst [vmem:[%s3 + $0x18] sm:$0xff] %v747
  // Predicated region
  $region14: #{gcn_forward.1} parent=0 // pred_check
    _
  $region15: #{gcn_forward.1} parent=0 // pred_check_branch
    %755 = sbr.rel (0) target = $region17
  $region16: #{gcn_forward.1} parent=0 // pred_region
    _
  $region17: #{gcn_forward.1} parent=0 // pred_fallthru
    _
  // Predicated region
  $region18: #{gcn_forward.1} parent=0 // pred_check
    _
  $region19: #{gcn_forward.1} parent=0 // pred_check_branch
    %757 = sbr.rel (0) target = $region21
  $region20: #{gcn_forward.1} parent=0 // pred_region
    _
  $region21: #{gcn_forward.1} parent=0 // pred_fallthru
    _

</llo_original>
